<compile_context>
chip_gen: v5e
topology: v5e:2x2
jax: 0.10.0
libtpu: 0.0.40
codegen_flags: <defaults>
</compile_context>

<pallas_src>
import functools

import jax
import jax.numpy as jnp
from jax.experimental import pallas as pl
from jax.experimental.pallas import tpu as pltpu

LANE = 128
_MIB = 1024 * 1024


def _round_up(x, m):
    return (x + m - 1) // m * m


def _clamp_vmem(nbytes):
    # >= 32 MiB scoped VMEM, capped at 64 MiB (safe on v7x, plenty on v5e/v6e).
    return int(min(max(nbytes, 32 * _MIB), 64 * _MIB))


def _pad2(arr, rows, cols, dtype):
    """Zero-pad a 2D array into a (rows, cols) buffer of `dtype` (single pass)."""
    out = jnp.zeros((rows, cols), dtype)
    return out.at[: arr.shape[0], : arr.shape[1]].set(arr.astype(dtype))


def _pick_tile(n, tile):
    """Row/K tile: multiple of 128, <= n_p/2 so grid axis 0 has >= 2 steps."""
    n_lane = _round_up(n, LANE)
    half = max(LANE, (n_lane // 2) // LANE * LANE)
    return max(LANE, min(_round_up(tile, LANE), half))


# --------------------------------------------------------------------------
# Fused single-call kernel (small graphs: everything VMEM-resident).
# --------------------------------------------------------------------------
def _fused_kernel(a_ref, x_ref, w1_ref, w2_ref, b1_ref, b2_ref, alpha_ref,
                  o_ref):
    alpha = alpha_ref[0, 0]
    # P1 = X @ W1   (bf16 MXU, f32 accumulate)
    p1 = jnp.dot(x_ref[...], w1_ref[...], preferred_element_type=jnp.float32)
    # H = PReLU(A @ P1 + b1)
    h = jnp.dot(a_ref[...], p1.astype(jnp.bfloat16),
                preferred_element_type=jnp.float32) + b1_ref[...]
    h = jnp.where(h >= 0, h, alpha * h)
    # P2 = H @ W2
    p2 = jnp.dot(h.astype(jnp.bfloat16), w2_ref[...],
                 preferred_element_type=jnp.float32)
    # out = A @ P2 + b2
    o_ref[...] = (jnp.dot(a_ref[...], p2.astype(jnp.bfloat16),
                          preferred_element_type=jnp.float32)
                  + b2_ref[...]).astype(o_ref.dtype)


def _fused_call(a_p, x_p, w1_p, w2_p, b1_p, b2_p, alpha):
    n_p = a_p.shape[0]
    out_p = w2_p.shape[1]
    vmem = pltpu.MemorySpace.VMEM
    smem = pltpu.MemorySpace.SMEM
    need = (a_p.size * 2 + x_p.size * 2 + w1_p.size * 2 + w2_p.size * 2
            + n_p * out_p * 4 + n_p * (w1_p.shape[1] + out_p) * 8 + 2 * _MIB)
    return pl.pallas_call(
        _fused_kernel,
        out_shape=jax.ShapeDtypeStruct((n_p, out_p), jnp.float32),
        in_specs=[pl.BlockSpec(memory_space=vmem)] * 6
        + [pl.BlockSpec(memory_space=smem)],
        out_specs=pl.BlockSpec(memory_space=vmem),
        compiler_params=pltpu.CompilerParams(
            vmem_limit_bytes=_clamp_vmem(need)),
    )(a_p, x_p, w1_p, w2_p, b1_p, b2_p, alpha)


# --------------------------------------------------------------------------
# Tiled path (large graphs): A streams, features stay resident in VMEM.
# --------------------------------------------------------------------------
def _layer1_kernel(a_ref, p1_ref, w2_ref, b1_ref, alpha_ref, p2_ref, acc_ref,
                   *, tk):
    """acc += A_tile @ P1_slice; finalize: P2_tile = PReLU(acc + b1) @ W2."""
    k = pl.program_id(1)

    @pl.when(k == 0)
    def _init():
        acc_ref[...] = jnp.zeros_like(acc_ref)

    ks = pl.multiple_of(k * tk, tk)
    acc_ref[...] += jnp.dot(a_ref[...], p1_ref[pl.ds(ks, tk), :],
                            preferred_element_type=jnp.float32)

    @pl.when(k == pl.num_programs(1) - 1)
    def _finalize():
        alpha = alpha_ref[0, 0]
        h = acc_ref[...] + b1_ref[...]
        h = jnp.where(h >= 0, h, alpha * h)
        p2 = jnp.dot(h.astype(jnp.bfloat16), w2_ref[...],
                     preferred_element_type=jnp.float32)
        p2_ref[...] = p2.astype(p2_ref.dtype)


def _layer2_kernel(a_ref, p2_ref, b2_ref, o_ref, acc_ref, *, tk):
    """acc += A_tile @ P2_slice; finalize: out = acc + b2."""
    k = pl.program_id(1)

    @pl.when(k == 0)
    def _init():
        acc_ref[...] = jnp.zeros_like(acc_ref)

    ks = pl.multiple_of(k * tk, tk)
    acc_ref[...] += jnp.dot(a_ref[...], p2_ref[pl.ds(ks, tk), :],
                            preferred_element_type=jnp.float32)

    @pl.when(k == pl.num_programs(1) - 1)
    def _finalize():
        o_ref[...] = (acc_ref[...] + b2_ref[...]).astype(o_ref.dtype)


def _layer1_call(a_p, p1, w2_p, b1_p, alpha, *, tm, tk):
    n_p = a_p.shape[0]
    hid_p = p1.shape[1]
    out_p = w2_p.shape[1]
    vmem = pltpu.MemorySpace.VMEM
    smem = pltpu.MemorySpace.SMEM
    need = (2 * tm * tk * 2 + 2 * n_p * hid_p * 2 + 2 * hid_p * out_p * 2
            + 2 * tm * out_p * 2 + tm * hid_p * 4 + 2 * _MIB)
    return pl.pallas_call(
        functools.partial(_layer1_kernel, tk=tk),
        out_shape=jax.ShapeDtypeStruct((n_p, out_p), jnp.bfloat16),
        grid=(n_p // tm, n_p // tk),
        in_specs=[
            pl.BlockSpec((tm, tk), lambda i, k: (i, k), memory_space=vmem),      # A tile (streams)
            pl.BlockSpec((n_p, hid_p), lambda i, k: (0, 0), memory_space=vmem),  # P1 (resident)
            pl.BlockSpec((hid_p, out_p), lambda i, k: (0, 0), memory_space=vmem),  # W2 (resident)
            pl.BlockSpec((1, hid_p), lambda i, k: (0, 0), memory_space=vmem),    # b1 (resident)
            pl.BlockSpec(memory_space=smem),                                     # alpha scalar
        ],
        out_specs=pl.BlockSpec((tm, out_p), lambda i, k: (i, 0),
                               memory_space=vmem),
        scratch_shapes=[pltpu.VMEM((tm, hid_p), jnp.float32)],
        compiler_params=pltpu.CompilerParams(
            dimension_semantics=("parallel", "arbitrary"),
            vmem_limit_bytes=_clamp_vmem(need)),
    )(a_p, p1, w2_p, b1_p, alpha)


def _layer2_call(a_p, p2, b2_p, *, tm, tk):
    n_p = a_p.shape[0]
    out_p = p2.shape[1]
    vmem = pltpu.MemorySpace.VMEM
    need = (2 * tm * tk * 2 + 2 * n_p * out_p * 2 + 2 * tm * out_p * 4
            + tm * out_p * 4 + 2 * _MIB)
    return pl.pallas_call(
        functools.partial(_layer2_kernel, tk=tk),
        out_shape=jax.ShapeDtypeStruct((n_p, out_p), jnp.float32),
        grid=(n_p // tm, n_p // tk),
        in_specs=[
            pl.BlockSpec((tm, tk), lambda i, k: (i, k), memory_space=vmem),      # A tile (streams)
            pl.BlockSpec((n_p, out_p), lambda i, k: (0, 0), memory_space=vmem),  # P2 (resident)
            pl.BlockSpec((1, out_p), lambda i, k: (0, 0), memory_space=vmem),    # b2 (resident)
        ],
        out_specs=pl.BlockSpec((tm, out_p), lambda i, k: (i, 0),
                               memory_space=vmem),
        scratch_shapes=[pltpu.VMEM((tm, out_p), jnp.float32)],
        compiler_params=pltpu.CompilerParams(
            dimension_semantics=("parallel", "arbitrary"),
            vmem_limit_bytes=_clamp_vmem(need)),
    )(a_p, p2, b2_p)


# --------------------------------------------------------------------------
# Encoder forward.
# --------------------------------------------------------------------------
def gcn_encoder(a_hat, x, w1, b1, w2, b2, alpha, *, tile=1024,
                force_tiled=False):
    """Encoder.forward: out = gcn2(PReLU(gcn1(x)))."""
    n, in_c = x.shape
    hidden = w1.shape[1]
    out_c = w2.shape[1]
    cin_p = _round_up(in_c, LANE)
    hid_p = _round_up(hidden, LANE)
    out_p = _round_up(out_c, LANE)

    n_lane = _round_up(n, LANE)
    fused_bytes = (n_lane * n_lane * 2 + n_lane * cin_p * 2
                   + cin_p * hid_p * 2 + hid_p * out_p * 2
                   + n_lane * out_p * 4 + n_lane * (hid_p + out_p) * 8)
    use_fused = (not force_tiled) and fused_bytes <= 20 * _MIB

    if use_fused:
        n_p = n_lane
        a_p = _pad2(a_hat, n_p, n_p, jnp.bfloat16)
        x_p = _pad2(x, n_p, cin_p, jnp.bfloat16)
        w1_p = _pad2(w1, cin_p, hid_p, jnp.bfloat16)
        w2_p = _pad2(w2, hid_p, out_p, jnp.bfloat16)
        b1_p = _pad2(b1, 1, hid_p, jnp.float32)
        b2_p = _pad2(b2, 1, out_p, jnp.float32)
        out = _fused_call(a_p, x_p, w1_p, w2_p, b1_p, b2_p, alpha)
    else:
        t = _pick_tile(n, tile)
        n_p = _round_up(n, t)
        a_p = _pad2(a_hat, n_p, n_p, jnp.bfloat16)
        x_p = _pad2(x, n_p, cin_p, jnp.bfloat16)
        w1_p = _pad2(w1, cin_p, hid_p, jnp.bfloat16)
        w2_p = _pad2(w2, hid_p, out_p, jnp.bfloat16)
        b1_p = _pad2(b1, 1, hid_p, jnp.float32)
        b2_p = _pad2(b2, 1, out_p, jnp.float32)
        # Hoisted feature transform (tiny [n, cin] x [cin, hid] matmul).
        p1 = jnp.dot(x_p, w1_p,
                     preferred_element_type=jnp.float32).astype(jnp.bfloat16)
        p2 = _layer1_call(a_p, p1, w2_p, b1_p, alpha, tm=t, tk=t)
        out = _layer2_call(a_p, p2, b2_p, tm=t, tk=t)

    return out[:n, :out_c]


# --------------------------------------------------------------------------
# Graph / parameter construction + references (plain JAX glue).
# --------------------------------------------------------------------------
def normalized_adjacency(edge_index, num_nodes):
    """Dense A_hat = D^{-1/2}(A + I)D^{-1/2}, A_hat[target, source]."""
    src, dst = edge_index[0], edge_index[1]
    loop = jnp.arange(num_nodes, dtype=edge_index.dtype)
    src = jnp.concatenate([src, loop])
    dst = jnp.concatenate([dst, loop])
    deg = jnp.zeros((num_nodes,), jnp.float32).at[dst].add(1.0)
    dis = jnp.where(deg > 0, 1.0 / jnp.sqrt(deg), 0.0)
    norm = dis[src] * dis[dst]
    return jnp.zeros((num_nodes, num_nodes), jnp.float32).at[dst, src].add(norm)


def init_params(key, in_channels, hidden, out_channels):
    """Glorot-uniform weights, zero bias, alpha=0.25 (torch PReLU default)."""
    k1, k2 = jax.random.split(key)

    def glorot(k, fan_in, fan_out):
        lim = jnp.sqrt(6.0 / (fan_in + fan_out))
        return jax.random.uniform(k, (fan_in, fan_out), jnp.float32, -lim, lim)

    w1 = glorot(k1, in_channels, hidden)
    b1 = jnp.zeros((1, hidden), jnp.float32)
    w2 = glorot(k2, hidden, out_channels)
    b2 = jnp.zeros((1, out_channels), jnp.float32)
    alpha = jnp.array([[0.25]], dtype=jnp.float32)
    return w1, b1, w2, b2, alpha


def reference_f32(a, x, w1, b1, w2, b2, alpha):
    """Pure f32 reference matching the PyTorch module exactly."""
    h = a @ (x @ w1) + b1
    h = jnp.where(h >= 0, h, alpha[0, 0] * h)
    return a @ (h @ w2) + b2


def reference_bf16(a, x, w1, b1, w2, b2, alpha):
    """Reference emulating the kernel's precision (bf16 MXU inputs, f32 acc)."""
    ab = a.astype(jnp.bfloat16)
    p1 = jnp.dot(x.astype(jnp.bfloat16), w1.astype(jnp.bfloat16),
                 preferred_element_type=jnp.float32).astype(jnp.bfloat16)
    h = jnp.dot(ab, p1, preferred_element_type=jnp.float32) + b1
    h = jnp.where(h >= 0, h, alpha[0, 0] * h)
    p2 = jnp.dot(h.astype(jnp.bfloat16), w2.astype(jnp.bfloat16),
                 preferred_element_type=jnp.float32).astype(jnp.bfloat16)
    return jnp.dot(ab, p2, preferred_element_type=jnp.float32) + b2


if __name__ == "__main__":
    key = jax.random.PRNGKey(0)
    k_x, k_p = jax.random.split(key)

    # Small shapes implied by the module: N nodes, in_channels, hidden, out.
    N, IN_C, HIDDEN, OUT_C = 200, 4, 32, 16

    x = jax.random.normal(k_x, (N, IN_C), dtype=jnp.float32)

    # Deterministic graph: ring plus +7 chords (directed both ways).
    idx = jnp.arange(N, dtype=jnp.int32)
    nxt = (idx + 1) % N
    chd = (idx + 7) % N
    edge_index = jnp.stack(
        [jnp.concatenate([idx, nxt, idx, chd]),
         jnp.concatenate([nxt, idx, chd, idx])], axis=0)  # (2, 4N)

    a_hat = normalized_adjacency(edge_index, N)
    w1, b1, w2, b2, alpha = init_params(k_p, IN_C, HIDDEN, OUT_C)

    # Default dispatch: small problem -> single fused VMEM-resident kernel.
    out_fused = gcn_encoder(a_hat, x, w1, b1, w2, b2, alpha)
    out_fused = jax.block_until_ready(out_fused)

    # Also exercise the tiled/streaming path (grid=(2,2) with K accumulator).
    out_tiled = gcn_encoder(a_hat, x, w1, b1, w2, b2, alpha,
                            tile=128, force_tiled=True)
    out_tiled = jax.block_until_ready(out_tiled)

    ref_b = reference_bf16(a_hat, x, w1, b1, w2, b2, alpha)
    ref_f = reference_f32(a_hat, x, w1, b1, w2, b2, alpha)

    assert out_fused.shape == (N, OUT_C)
    assert out_tiled.shape == (N, OUT_C)
    assert jnp.allclose(out_fused, ref_b, atol=5e-3, rtol=5e-3), \
        "fused kernel mismatch vs bf16-precision reference"
    assert jnp.allclose(out_tiled, ref_b, atol=5e-3, rtol=5e-3), \
        "tiled kernel mismatch vs bf16-precision reference"
    assert jnp.allclose(out_fused, out_tiled, atol=5e-3, rtol=5e-3), \
        "fused vs tiled path mismatch"
    assert jnp.allclose(out_fused, ref_f, atol=5e-2, rtol=5e-2), \
        "mismatch vs f32 module reference"

    print("KERNEL_OK")
</pallas_src>

<mosaic_0001>
module attributes {stable_mosaic.version = 11 : i64} {
  func.func @_fused_kernel(%arg0: memref<256x256xbf16, #tpu.memory_space<vmem>>, %arg1: memref<256x128xbf16, #tpu.memory_space<vmem>>, %arg2: memref<128x128xbf16, #tpu.memory_space<vmem>>, %arg3: memref<128x128xbf16, #tpu.memory_space<vmem>>, %arg4: memref<1x128xf32, #tpu.memory_space<vmem>>, %arg5: memref<1x128xf32, #tpu.memory_space<vmem>>, %arg6: memref<1x1xf32, #tpu.memory_space<smem>>, %arg7: memref<256x128xf32, #tpu.memory_space<vmem>>) attributes {dimension_semantics = [], scalar_prefetch = 0 : i64, scratch_operands = 0 : i64, tpu.core_type = #tpu.core_type<tc>} {
    %c0 = arith.constant 0 : index
    %c0_0 = arith.constant 0 : index
    %0 = memref.load %arg6[%c0, %c0_0] : memref<1x1xf32, #tpu.memory_space<smem>>
    %c0_1 = arith.constant 0 : index
    %c0_2 = arith.constant 0 : index
    %1 = vector.load %arg1[%c0_1, %c0_2] : memref<256x128xbf16, #tpu.memory_space<vmem>>, vector<256x128xbf16>
    %c0_3 = arith.constant 0 : index
    %c0_4 = arith.constant 0 : index
    %2 = vector.load %arg2[%c0_3, %c0_4] : memref<128x128xbf16, #tpu.memory_space<vmem>>, vector<128x128xbf16>
    %cst = arith.constant dense<0.000000e+00> : vector<256x128xf32>
    %3 = tpu.matmul %1, %2, %cst {dimension_numbers = #tpu.dot_dimension_numbers<[1], [0], [0], [1], [0, 0, 1, 1], [], []>} : vector<256x128xbf16>, vector<128x128xbf16>, vector<256x128xf32> -> vector<256x128xf32>
    %c0_5 = arith.constant 0 : index
    %c0_6 = arith.constant 0 : index
    %4 = vector.load %arg0[%c0_5, %c0_6] : memref<256x256xbf16, #tpu.memory_space<vmem>>, vector<256x256xbf16>
    %5 = arith.truncf %3 : vector<256x128xf32> to vector<256x128xbf16>
    %cst_7 = arith.constant dense<0.000000e+00> : vector<256x128xf32>
    %6 = tpu.matmul %4, %5, %cst_7 {dimension_numbers = #tpu.dot_dimension_numbers<[1], [0], [0], [1], [0, 0, 1, 1], [], []>} : vector<256x256xbf16>, vector<256x128xbf16>, vector<256x128xf32> -> vector<256x128xf32>
    %c0_8 = arith.constant 0 : index
    %c0_9 = arith.constant 0 : index
    %7 = vector.load %arg4[%c0_8, %c0_9] : memref<1x128xf32, #tpu.memory_space<vmem>>, vector<1x128xf32>
    %8 = vector.broadcast %7 : vector<1x128xf32> to vector<256x128xf32>
    %9 = arith.addf %6, %8 : vector<256x128xf32>
    %cst_10 = arith.constant 0.000000e+00 : f32
    %10 = vector.broadcast %cst_10 : f32 to vector<256x128xf32>
    %11 = arith.cmpf oge, %9, %10 : vector<256x128xf32>
    %12 = vector.broadcast %0 : f32 to vector<256x128xf32>
    %13 = arith.mulf %12, %9 : vector<256x128xf32>
    %14 = arith.select %11, %9, %13 : vector<256x128xi1>, vector<256x128xf32>
    %15 = arith.truncf %14 : vector<256x128xf32> to vector<256x128xbf16>
    %c0_11 = arith.constant 0 : index
    %c0_12 = arith.constant 0 : index
    %16 = vector.load %arg3[%c0_11, %c0_12] : memref<128x128xbf16, #tpu.memory_space<vmem>>, vector<128x128xbf16>
    %cst_13 = arith.constant dense<0.000000e+00> : vector<256x128xf32>
    %17 = tpu.matmul %15, %16, %cst_13 {dimension_numbers = #tpu.dot_dimension_numbers<[1], [0], [0], [1], [0, 0, 1, 1], [], []>} : vector<256x128xbf16>, vector<128x128xbf16>, vector<256x128xf32> -> vector<256x128xf32>
    %c0_14 = arith.constant 0 : index
    %c0_15 = arith.constant 0 : index
    %18 = vector.load %arg0[%c0_14, %c0_15] : memref<256x256xbf16, #tpu.memory_space<vmem>>, vector<256x256xbf16>
    %19 = arith.truncf %17 : vector<256x128xf32> to vector<256x128xbf16>
    %cst_16 = arith.constant dense<0.000000e+00> : vector<256x128xf32>
    %20 = tpu.matmul %18, %19, %cst_16 {dimension_numbers = #tpu.dot_dimension_numbers<[1], [0], [0], [1], [0, 0, 1, 1], [], []>} : vector<256x256xbf16>, vector<256x128xbf16>, vector<256x128xf32> -> vector<256x128xf32>
    %c0_17 = arith.constant 0 : index
    %c0_18 = arith.constant 0 : index
    %21 = vector.load %arg5[%c0_17, %c0_18] : memref<1x128xf32, #tpu.memory_space<vmem>>, vector<1x128xf32>
    %22 = vector.broadcast %21 : vector<1x128xf32> to vector<256x128xf32>
    %23 = arith.addf %20, %22 : vector<256x128xf32>
    %c0_19 = arith.constant 0 : index
    %c0_20 = arith.constant 0 : index
    %24 = vector.load %arg7[%c0_19, %c0_20] : memref<256x128xf32, #tpu.memory_space<vmem>>, vector<256x128xf32>
    tpu.vector_store %arg7[%c0_19, %c0_20], %23 {strides = array<i32>} : memref<256x128xf32, #tpu.memory_space<vmem>>, vector<256x128xf32>,
    return
  }
}

</mosaic_0001>

<llo_original>
// kernel: tpu_custom_call.1
$region0: #{tpu_custom_call.1}
  #allocation0 [shape = 'u32[]', space=smem, size = 0x4, offset = 0x4, fixed_abs, tag = 'smem constant byte address 0x4 - core index']
  #allocation1 [shape = 'u32[72,128]{1,0:T(1,128)}', space=vmem, size = 0x9000, scoped, tag = 'internal scratch']
  #allocation2 [shape = 'f32[1,1]{1,0:T(1,128)S(6)}', space=smem, size = 0x200, scoped, tag = 'scoped memory for tpu_custom_call.1']
  %s0 = inlined_call_operand.hbm [shape: bf16[256,256], index: 0, kind: input, shape index: {}]
  %s1 = inlined_call_operand.hbm [shape: bf16[256,128], index: 1, kind: input, shape index: {}]
  %s2 = inlined_call_operand.hbm [shape: bf16[128,128], index: 2, kind: input, shape index: {}]
  %s3 = inlined_call_operand.hbm [shape: bf16[128,128], index: 3, kind: input, shape index: {}]
  %s4 = inlined_call_operand.vmem [shape: f32[1,128], index: 4, kind: input, shape index: {}]
  %s5 = inlined_call_operand.vmem [shape: f32[1,128], index: 5, kind: input, shape index: {}]
  %s6 = inlined_call_operand.<no memory space> [shape: f32[1,1], index: 6, kind: input, shape index: {}]
  %s7 = inlined_call_operand.hbm [shape: f32[256,128], index: 7, kind: output, shape index: {}]
  %s8 = sld [smem:[#allocation0]]
  $region54: #{tpu_custom_call.1} parent=0
    _
  %s10 = ssub.s32 1, %s8
  %s11 = scalar_select 0, %s10, %s8
  %12 = sst [smem:[#allocation2]] %s6
  $region1: #{tpu_custom_call.1} parent=0
    #allocation3 [shape = 'u8[131072]{0}', space=vmem, size = 0x20000, scoped, tag = 'input window, operand 0, single buffered']
    #allocation4 [shape = 's32[1]{0}', space=sflag, size = 0x4, scoped, tag = 'scoped memory for tpu_custom_call.1']
    #allocation5 [shape = 's32[1]{0}', space=sflag, size = 0x4, scoped, tag = 'scoped memory for tpu_custom_call.1']
    #allocation6 [shape = 'u8[65536]{0}', space=vmem, size = 0x10000, scoped, tag = 'input window, operand 1, single buffered']
    #allocation7 [shape = 's32[1]{0}', space=sflag, size = 0x4, scoped, tag = 'scoped memory for tpu_custom_call.1']
    #allocation8 [shape = 'u8[32768]{0}', space=vmem, size = 0x8000, scoped, tag = 'input window, operand 2, single buffered']
    #allocation9 [shape = 'u8[32768]{0}', space=vmem, size = 0x8000, scoped, tag = 'input window, operand 3, single buffered']
    #allocation10 [shape = 's32[1]{0}', space=sflag, size = 0x4, scoped, tag = 'scoped memory for tpu_custom_call.1']
    #allocation11 [shape = 'u8[131072]{0}', space=vmem, size = 0x20000, scoped, tag = 'output window, operand 0, single buffered']
    %13 = vsyncpa [#allocation4], 0
    %14 = vsyncpa [#allocation7], 0
    %15 = vsyncpa [#allocation10], 0
    %16 = vsyncpa [#allocation5], 0
    // Predicated region
    $region2: #{tpu_custom_call.1} parent=1 // pred_check
      _
    $region3: #{tpu_custom_call.1} parent=1 // pred_check_branch
      %18 = sbr.rel (0) target = $region5
    $region4: #{tpu_custom_call.1} parent=1 // pred_region
      %20 = vsyncadd [#allocation4], 0
      %s21 = sshll.u32 %s0, 4
      %s22 = int_to_ptr.hbm [resolvable:$true] %s21
      %s23 = sshll.u32 [#allocation3], 4
      %s24 = int_to_ptr.vmem [resolvable:$true] %s23
      %29 = dma.hbm_to_vmem [thread:$0]  %s22, 4096, %s24, [#allocation4], 128, 128, 8
    $region5: #{tpu_custom_call.1} parent=1 // pred_fallthru
      _
    // Predicated region
    $region6: #{tpu_custom_call.1} parent=1 // pred_check
      _
    $region7: #{tpu_custom_call.1} parent=1 // pred_check_branch
      %31 = sbr.rel (0) target = $region9
    $region8: #{tpu_custom_call.1} parent=1 // pred_region
      %33 = vsyncadd [#allocation7], 0
      %s34 = sshll.u32 %s1, 4
      %s35 = int_to_ptr.hbm [resolvable:$true] %s34
      %s36 = sshll.u32 [#allocation6], 4
      %s37 = int_to_ptr.vmem [resolvable:$true] %s36
      %42 = dma.hbm_to_vmem [thread:$0]  %s35, 2048, %s37, [#allocation7], 64, 64, 4
    $region9: #{tpu_custom_call.1} parent=1 // pred_fallthru
      _
    // Predicated region
    $region10: #{tpu_custom_call.1} parent=1 // pred_check
      _
    $region11: #{tpu_custom_call.1} parent=1 // pred_check_branch
      %44 = sbr.rel (0) target = $region13
    $region12: #{tpu_custom_call.1} parent=1 // pred_region
      %46 = vsyncadd [#allocation7], 0
      %s47 = sshll.u32 %s2, 4
      %s48 = int_to_ptr.hbm [resolvable:$true] %s47
      %s49 = sshll.u32 [#allocation8], 4
      %s50 = int_to_ptr.vmem [resolvable:$true] %s49
      %55 = dma.hbm_to_vmem [thread:$0]  %s48, 1024, %s50, [#allocation7], 64, 64, 4
    $region13: #{tpu_custom_call.1} parent=1 // pred_fallthru
      _
    // Predicated region
    $region14: #{tpu_custom_call.1} parent=1 // pred_check
      _
    $region15: #{tpu_custom_call.1} parent=1 // pred_check_branch
      %57 = sbr.rel (0) target = $region17
    $region16: #{tpu_custom_call.1} parent=1 // pred_region
      %59 = vsyncadd [#allocation10], 0
      %s60 = sshll.u32 %s3, 4
      %s61 = int_to_ptr.hbm [resolvable:$true] %s60
      %s62 = sshll.u32 [#allocation9], 4
      %s63 = int_to_ptr.vmem [resolvable:$true] %s62
      %68 = dma.hbm_to_vmem [thread:$0]  %s61, 1024, %s63, [#allocation10], 64, 64, 4
    $region17: #{tpu_custom_call.1} parent=1 // pred_fallthru
      _
    // Predicated region
    $region18: #{tpu_custom_call.1} parent=1 // pred_check
      _
    $region19: #{tpu_custom_call.1} parent=1 // pred_check_branch
      %70 = sbr.rel (0) target = $region21
    $region20: #{tpu_custom_call.1} parent=1 // pred_region
      _
    $region21: #{tpu_custom_call.1} parent=1 // pred_fallthru
      _
    // Predicated region
    $region22: #{tpu_custom_call.1} parent=1 // pred_check
      _
    $region23: #{tpu_custom_call.1} parent=1 // pred_check_branch
      %72 = sbr.rel (0) target = $region25
    $region24: #{tpu_custom_call.1} parent=1 // pred_region
      _
    $region25: #{tpu_custom_call.1} parent=1 // pred_fallthru
      _
    // Predicated region
    $region26: #{tpu_custom_call.1} parent=1 // pred_check
      _
    $region27: #{tpu_custom_call.1} parent=1 // pred_check_branch
      %74 = sbr.rel (0) target = $region29
    $region28: #{tpu_custom_call.1} parent=1 // pred_region
      _
    $region29: #{tpu_custom_call.1} parent=1 // pred_fallthru
      _
    // Predicated region
    $region30: #{tpu_custom_call.1} parent=1 // pred_check
      _
    $region31: #{tpu_custom_call.1} parent=1 // pred_check_branch
      %76 = sbr.rel (0) target = $region33
    $region32: #{tpu_custom_call.1} parent=1 // pred_region
      %78 = dma.done [#allocation4], 4096
    $region33: #{tpu_custom_call.1} parent=1 // pred_fallthru
      _
    // Predicated region
    $region34: #{tpu_custom_call.1} parent=1 // pred_check
      _
    $region35: #{tpu_custom_call.1} parent=1 // pred_check_branch
      %80 = sbr.rel (0) target = $region37
    $region36: #{tpu_custom_call.1} parent=1 // pred_region
      %82 = dma.done [#allocation7], 2048
    $region37: #{tpu_custom_call.1} parent=1 // pred_fallthru
      _
    // Predicated region
    $region38: #{tpu_custom_call.1} parent=1 // pred_check
      _
    $region39: #{tpu_custom_call.1} parent=1 // pred_check_branch
      %84 = sbr.rel (0) target = $region41
    $region40: #{tpu_custom_call.1} parent=1 // pred_region
      %86 = dma.done [#allocation7], 1024
    $region41: #{tpu_custom_call.1} parent=1 // pred_fallthru
      _
    // Predicated region
    $region42: #{tpu_custom_call.1} parent=1 // pred_check
      _
    $region43: #{tpu_custom_call.1} parent=1 // pred_check_branch
      %88 = sbr.rel (0) target = $region45
    $region44: #{tpu_custom_call.1} parent=1 // pred_region
      %90 = dma.done [#allocation10], 1024
    $region45: #{tpu_custom_call.1} parent=1 // pred_fallthru
      _
    %s91 = sld [smem:[#allocation2]]
    %v92 = vld [vmem:[#allocation6] sm:$0xf]
    %v93 = vld [vmem:[#allocation6 + $0x4] sm:$0xf]
    %v94 = vld [vmem:[#allocation6 + $0x8] sm:$0xf]
    %v95 = vld [vmem:[#allocation6 + $0xc] sm:$0xf]
    %v96 = vld [vmem:[#allocation6 + $0x10] sm:$0xf]
    %v97 = vld [vmem:[#allocation6 + $0x14] sm:$0xf]
    %v98 = vld [vmem:[#allocation6 + $0x18] sm:$0xf]
    %v99 = vld [vmem:[#allocation6 + $0x1c] sm:$0xf]
    %v100 = vld [vmem:[#allocation6 + $0x20] sm:$0xf]
    %v101 = vld [vmem:[#allocation6 + $0x24] sm:$0xf]
    %v102 = vld [vmem:[#allocation6 + $0x28] sm:$0xf]
    %v103 = vld [vmem:[#allocation6 + $0x2c] sm:$0xf]
    %v104 = vld [vmem:[#allocation6 + $0x30] sm:$0xf]
    %v105 = vld [vmem:[#allocation6 + $0x34] sm:$0xf]
    %v106 = vld [vmem:[#allocation6 + $0x38] sm:$0xf]
    %v107 = vld [vmem:[#allocation6 + $0x3c] sm:$0xf]
    %v108 = vld [vmem:[#allocation6 + $0x40] sm:$0xf]
    %v109 = vld [vmem:[#allocation6 + $0x44] sm:$0xf]
    %v110 = vld [vmem:[#allocation6 + $0x48] sm:$0xf]
    %v111 = vld [vmem:[#allocation6 + $0x4c] sm:$0xf]
    %v112 = vld [vmem:[#allocation6 + $0x50] sm:$0xf]
    %v113 = vld [vmem:[#allocation6 + $0x54] sm:$0xf]
    %v114 = vld [vmem:[#allocation6 + $0x58] sm:$0xf]
    %v115 = vld [vmem:[#allocation6 + $0x5c] sm:$0xf]
    %v116 = vld [vmem:[#allocation6 + $0x60] sm:$0xf]
    %v117 = vld [vmem:[#allocation6 + $0x64] sm:$0xf]
    %v118 = vld [vmem:[#allocation6 + $0x68] sm:$0xf]
    %v119 = vld [vmem:[#allocation6 + $0x6c] sm:$0xf]
    %v120 = vld [vmem:[#allocation6 + $0x70] sm:$0xf]
    %v121 = vld [vmem:[#allocation6 + $0x74] sm:$0xf]
    %v122 = vld [vmem:[#allocation6 + $0x78] sm:$0xf]
    %v123 = vld [vmem:[#allocation6 + $0x7c] sm:$0xf]
    %v124 = vld [vmem:[#allocation8] sm:$0xf]
    %v125 = vld [vmem:[#allocation8 + $0x4] sm:$0xf]
    %v126 = vld [vmem:[#allocation8 + $0x8] sm:$0xf]
    %v127 = vld [vmem:[#allocation8 + $0xc] sm:$0xf]
    %v128 = vld [vmem:[#allocation8 + $0x10] sm:$0xf]
    %v129 = vld [vmem:[#allocation8 + $0x14] sm:$0xf]
    %v130 = vld [vmem:[#allocation8 + $0x18] sm:$0xf]
    %v131 = vld [vmem:[#allocation8 + $0x1c] sm:$0xf]
    %v132 = vld [vmem:[#allocation8 + $0x20] sm:$0xf]
    %v133 = vld [vmem:[#allocation8 + $0x24] sm:$0xf]
    %v134 = vld [vmem:[#allocation8 + $0x28] sm:$0xf]
    %v135 = vld [vmem:[#allocation8 + $0x2c] sm:$0xf]
    %v136 = vld [vmem:[#allocation8 + $0x30] sm:$0xf]
    %v137 = vld [vmem:[#allocation8 + $0x34] sm:$0xf]
    %v138 = vld [vmem:[#allocation8 + $0x38] sm:$0xf]
    %v139 = vld [vmem:[#allocation8 + $0x3c] sm:$0xf]
    %v172 = vunpack.c.l.b16 %v92
    %v173 = vunpack.c.l.b16 %v93
    %v174 = vunpack.c.l.b16 %v94
    %v175 = vunpack.c.l.b16 %v95
    %v176 = vunpack.c.l.b16 %v96
    %v177 = vunpack.c.l.b16 %v97
    %v178 = vunpack.c.l.b16 %v98
    %v179 = vunpack.c.l.b16 %v99
    %v180 = vunpack.c.l.b16 %v100
    %v181 = vunpack.c.l.b16 %v101
    %v182 = vunpack.c.l.b16 %v102
    %v183 = vunpack.c.l.b16 %v103
    %v184 = vunpack.c.l.b16 %v104
    %v185 = vunpack.c.l.b16 %v105
    %v186 = vunpack.c.l.b16 %v106
    %v187 = vunpack.c.l.b16 %v107
    %v188 = vunpack.c.l.b16 %v108
    %v189 = vunpack.c.l.b16 %v109
    %v190 = vunpack.c.l.b16 %v110
    %v191 = vunpack.c.l.b16 %v111
    %v192 = vunpack.c.l.b16 %v112
    %v193 = vunpack.c.l.b16 %v113
    %v194 = vunpack.c.l.b16 %v114
    %v195 = vunpack.c.l.b16 %v115
    %v196 = vunpack.c.l.b16 %v116
    %v197 = vunpack.c.l.b16 %v117
    %v198 = vunpack.c.l.b16 %v118
    %v199 = vunpack.c.l.b16 %v119
    %v200 = vunpack.c.l.b16 %v120
    %v201 = vunpack.c.l.b16 %v121
    %v202 = vunpack.c.l.b16 %v122
    %v203 = vunpack.c.l.b16 %v123
    %v204 = vpack.c.b16 %v173, %v172
    %v205 = vpack.c.b16 %v175, %v174
    %v206 = vpack.c.b16 %v177, %v176
    %v207 = vpack.c.b16 %v179, %v178
    %v208 = vpack.c.b16 %v181, %v180
    %v209 = vpack.c.b16 %v183, %v182
    %v210 = vpack.c.b16 %v185, %v184
    %v211 = vpack.c.b16 %v187, %v186
    %v212 = vpack.c.b16 %v189, %v188
    %v213 = vpack.c.b16 %v191, %v190
    %v214 = vpack.c.b16 %v193, %v192
    %v215 = vpack.c.b16 %v195, %v194
    %v216 = vpack.c.b16 %v197, %v196
    %v217 = vpack.c.b16 %v199, %v198
    %v218 = vpack.c.b16 %v201, %v200
    %v219 = vpack.c.b16 %v203, %v202
    %v252 = vunpack.c.l.b16 %v124
    %v253 = vunpack.c.l.b16 %v125
    %v254 = vunpack.c.l.b16 %v126
    %v255 = vunpack.c.l.b16 %v127
    %v256 = vunpack.c.l.b16 %v128
    %v257 = vunpack.c.l.b16 %v129
    %v258 = vunpack.c.l.b16 %v130
    %v259 = vunpack.c.l.b16 %v131
    %v260 = vunpack.c.l.b16 %v132
    %v261 = vunpack.c.l.b16 %v133
    %v262 = vunpack.c.l.b16 %v134
    %v263 = vunpack.c.l.b16 %v135
    %v264 = vunpack.c.l.b16 %v136
    %v265 = vunpack.c.l.b16 %v137
    %v266 = vunpack.c.l.b16 %v138
    %v267 = vunpack.c.l.b16 %v139
    %v268 = vpack.c.b16 %v253, %v252
    %v269 = vpack.c.b16 %v255, %v254
    %v270 = vpack.c.b16 %v257, %v256
    %v271 = vpack.c.b16 %v259, %v258
    %v272 = vpack.c.b16 %v261, %v260
    %v273 = vpack.c.b16 %v263, %v262
    %v274 = vpack.c.b16 %v265, %v264
    %v275 = vpack.c.b16 %v267, %v266
    %284 = vmatpush.bf16.msra.mxu0 %v275
    %285 = vmatpush.bf16.msra.mxu0 %v274
    %286 = vmatpush.bf16.msra.mxu0 %v273
    %287 = vmatpush.bf16.msra.mxu0 %v272
    %288 = vmatpush.bf16.msra.mxu0 %v271
    %289 = vmatpush.bf16.msra.mxu0 %v270
    %290 = vmatpush.bf16.msra.mxu0 %v269
    %291 = vmatpush.bf16.msra.mxu0 %v268
    %292 = vmatmul.bf16.gmra.mxu0 %v204
    %v293 = vpop.f32.mrf.mxu0
    %v294 = vadd.f32 0.0, %v293
    %v295 = vpop.f32.mrf.mxu0
    %v296 = vadd.f32 0.0, %v295
    %297 = vmatmul.bf16.gmra.mxu0 %v205
    %v298 = vpop.f32.mrf.mxu0
    %v299 = vadd.f32 0.0, %v298
    %v300 = vpop.f32.mrf.mxu0
    %v301 = vadd.f32 0.0, %v300
    %302 = vmatmul.bf16.gmra.mxu0 %v206
    %v303 = vpop.f32.mrf.mxu0
    %v304 = vadd.f32 0.0, %v303
    %v305 = vpop.f32.mrf.mxu0
    %v306 = vadd.f32 0.0, %v305
    %307 = vmatmul.bf16.gmra.mxu0 %v207
    %v308 = vpop.f32.mrf.mxu0
    %v309 = vadd.f32 0.0, %v308
    %v310 = vpop.f32.mrf.mxu0
    %v311 = vadd.f32 0.0, %v310
    %312 = vmatmul.bf16.gmra.mxu0 %v208
    %v313 = vpop.f32.mrf.mxu0
    %v314 = vadd.f32 0.0, %v313
    %v315 = vpop.f32.mrf.mxu0
    %v316 = vadd.f32 0.0, %v315
    %317 = vmatmul.bf16.gmra.mxu0 %v209
    %v318 = vpop.f32.mrf.mxu0
    %v319 = vadd.f32 0.0, %v318
    %v320 = vpop.f32.mrf.mxu0
    %v321 = vadd.f32 0.0, %v320
    %322 = vmatmul.bf16.gmra.mxu0 %v210
    %v323 = vpop.f32.mrf.mxu0
    %v324 = vadd.f32 0.0, %v323
    %v325 = vpop.f32.mrf.mxu0
    %v326 = vadd.f32 0.0, %v325
    %327 = vmatmul.bf16.gmra.mxu0 %v211
    %v328 = vpop.f32.mrf.mxu0
    %v329 = vadd.f32 0.0, %v328
    %v330 = vpop.f32.mrf.mxu0
    %v331 = vadd.f32 0.0, %v330
    %332 = vmatmul.bf16.gmra.mxu0 %v212
    %v333 = vpop.f32.mrf.mxu0
    %v334 = vadd.f32 0.0, %v333
    %v335 = vpop.f32.mrf.mxu0
    %v336 = vadd.f32 0.0, %v335
    %337 = vmatmul.bf16.gmra.mxu0 %v213
    %v338 = vpop.f32.mrf.mxu0
    %v339 = vadd.f32 0.0, %v338
    %v340 = vpop.f32.mrf.mxu0
    %v341 = vadd.f32 0.0, %v340
    %342 = vmatmul.bf16.gmra.mxu0 %v214
    %v343 = vpop.f32.mrf.mxu0
    %v344 = vadd.f32 0.0, %v343
    %v345 = vpop.f32.mrf.mxu0
    %v346 = vadd.f32 0.0, %v345
    %347 = vmatmul.bf16.gmra.mxu0 %v215
    %v348 = vpop.f32.mrf.mxu0
    %v349 = vadd.f32 0.0, %v348
    %v350 = vpop.f32.mrf.mxu0
    %v351 = vadd.f32 0.0, %v350
    %352 = vmatmul.bf16.gmra.mxu0 %v216
    %v353 = vpop.f32.mrf.mxu0
    %v354 = vadd.f32 0.0, %v353
    %v355 = vpop.f32.mrf.mxu0
    %v356 = vadd.f32 0.0, %v355
    %357 = vmatmul.bf16.gmra.mxu0 %v217
    %v358 = vpop.f32.mrf.mxu0
    %v359 = vadd.f32 0.0, %v358
    %v360 = vpop.f32.mrf.mxu0
    %v361 = vadd.f32 0.0, %v360
    %362 = vmatmul.bf16.gmra.mxu0 %v218
    %v363 = vpop.f32.mrf.mxu0
    %v364 = vadd.f32 0.0, %v363
    %v365 = vpop.f32.mrf.mxu0
    %v366 = vadd.f32 0.0, %v365
    %367 = vmatmul.bf16.gmra.mxu0 %v219
    %v368 = vpop.f32.mrf.mxu0
    %v369 = vadd.f32 0.0, %v368
    %v370 = vpop.f32.mrf.mxu0
    %v371 = vadd.f32 0.0, %v370
    %372 = vdwg.mxu0
    %v373 = vld [vmem:[#allocation3] sm:$0xff]
    %v374 = vld [vmem:[#allocation3 + $0x8] sm:$0xff]
    %v375 = vld [vmem:[#allocation3 + $0x10] sm:$0xff]
    %v376 = vld [vmem:[#allocation3 + $0x18] sm:$0xff]
    %v377 = vld [vmem:[#allocation3 + $0x20] sm:$0xff]
    %v378 = vld [vmem:[#allocation3 + $0x28] sm:$0xff]
    %v379 = vld [vmem:[#allocation3 + $0x30] sm:$0xff]
    %v380 = vld [vmem:[#allocation3 + $0x38] sm:$0xff]
    %v381 = vld [vmem:[#allocation3 + $0x40] sm:$0xff]
    %v382 = vld [vmem:[#allocation3 + $0x48] sm:$0xff]
    %v383 = vld [vmem:[#allocation3 + $0x50] sm:$0xff]
    %v384 = vld [vmem:[#allocation3 + $0x58] sm:$0xff]
    %v385 = vld [vmem:[#allocation3 + $0x60] sm:$0xff]
    %v386 = vld [vmem:[#allocation3 + $0x68] sm:$0xff]
    %v387 = vld [vmem:[#allocation3 + $0x70] sm:$0xff]
    %v388 = vld [vmem:[#allocation3 + $0x78] sm:$0xff]
    %v389 = vld [vmem:[#allocation3 + $0x80] sm:$0xff]
    %v390 = vld [vmem:[#allocation3 + $0x88] sm:$0xff]
    %v391 = vld [vmem:[#allocation3 + $0x90] sm:$0xff]
    %v392 = vld [vmem:[#allocation3 + $0x98] sm:$0xff]
    %v393 = vld [vmem:[#allocation3 + $0xa0] sm:$0xff]
    %v394 = vld [vmem:[#allocation3 + $0xa8] sm:$0xff]
    %v395 = vld [vmem:[#allocation3 + $0xb0] sm:$0xff]
    %v396 = vld [vmem:[#allocation3 + $0xb8] sm:$0xff]
    %v397 = vld [vmem:[#allocation3 + $0xc0] sm:$0xff]
    %v398 = vld [vmem:[#allocation3 + $0xc8] sm:$0xff]
    %v399 = vld [vmem:[#allocation3 + $0xd0] sm:$0xff]
    %v400 = vld [vmem:[#allocation3 + $0xd8] sm:$0xff]
    %v401 = vld [vmem:[#allocation3 + $0xe0] sm:$0xff]
    %v402 = vld [vmem:[#allocation3 + $0xe8] sm:$0xff]
    %v403 = vld [vmem:[#allocation3 + $0xf0] sm:$0xff]
    %v404 = vld [vmem:[#allocation3 + $0xf8] sm:$0xff]
    %v405 = vpack.c.bf16 %v296, %v294
    %v406 = vpack.c.bf16 %v301, %v299
    %v407 = vpack.c.bf16 %v306, %v304
    %v408 = vpack.c.bf16 %v311, %v309
    %v409 = vpack.c.bf16 %v316, %v314
    %v410 = vpack.c.bf16 %v321, %v319
    %v411 = vpack.c.bf16 %v326, %v324
    %v412 = vpack.c.bf16 %v331, %v329
    %v413 = vpack.c.bf16 %v336, %v334
    %v414 = vpack.c.bf16 %v341, %v339
    %v415 = vpack.c.bf16 %v346, %v344
    %v416 = vpack.c.bf16 %v351, %v349
    %v417 = vpack.c.bf16 %v356, %v354
    %v418 = vpack.c.bf16 %v361, %v359
    %v419 = vpack.c.bf16 %v366, %v364
    %v420 = vpack.c.bf16 %v371, %v369
    %v421 = vld [vmem:[%s4] sm:$0x1]
    %v423 = vperm.slane %v421, 0
    %v457 = vunpack.c.l.b16 %v373
    %v458 = vunpack.c.h.b16 %v373
    %v459 = vunpack.c.l.b16 %v374
    %v460 = vunpack.c.h.b16 %v374
    %v461 = vunpack.c.l.b16 %v375
    %v462 = vunpack.c.h.b16 %v375
    %v463 = vunpack.c.l.b16 %v376
    %v464 = vunpack.c.h.b16 %v376
    %v465 = vunpack.c.l.b16 %v377
    %v466 = vunpack.c.h.b16 %v377
    %v467 = vunpack.c.l.b16 %v378
    %v468 = vunpack.c.h.b16 %v378
    %v469 = vunpack.c.l.b16 %v379
    %v470 = vunpack.c.h.b16 %v379
    %v471 = vunpack.c.l.b16 %v380
    %v472 = vunpack.c.h.b16 %v380
    %v473 = vunpack.c.l.b16 %v381
    %v474 = vunpack.c.h.b16 %v381
    %v475 = vunpack.c.l.b16 %v382
    %v476 = vunpack.c.h.b16 %v382
    %v477 = vunpack.c.l.b16 %v383
    %v478 = vunpack.c.h.b16 %v383
    %v479 = vunpack.c.l.b16 %v384
    %v480 = vunpack.c.h.b16 %v384
    %v481 = vunpack.c.l.b16 %v385
    %v482 = vunpack.c.h.b16 %v385
    %v483 = vunpack.c.l.b16 %v386
    %v484 = vunpack.c.h.b16 %v386
    %v485 = vunpack.c.l.b16 %v387
    %v486 = vunpack.c.h.b16 %v387
    %v487 = vunpack.c.l.b16 %v388
    %v488 = vunpack.c.h.b16 %v388
    %v489 = vunpack.c.l.b16 %v389
    %v490 = vunpack.c.h.b16 %v389
    %v491 = vunpack.c.l.b16 %v390
    %v492 = vunpack.c.h.b16 %v390
    %v493 = vunpack.c.l.b16 %v391
    %v494 = vunpack.c.h.b16 %v391
    %v495 = vunpack.c.l.b16 %v392
    %v496 = vunpack.c.h.b16 %v392
    %v497 = vunpack.c.l.b16 %v393
    %v498 = vunpack.c.h.b16 %v393
    %v499 = vunpack.c.l.b16 %v394
    %v500 = vunpack.c.h.b16 %v394
    %v501 = vunpack.c.l.b16 %v395
    %v502 = vunpack.c.h.b16 %v395
    %v503 = vunpack.c.l.b16 %v396
    %v504 = vunpack.c.h.b16 %v396
    %v505 = vunpack.c.l.b16 %v397
    %v506 = vunpack.c.h.b16 %v397
    %v507 = vunpack.c.l.b16 %v398
    %v508 = vunpack.c.h.b16 %v398
    %v509 = vunpack.c.l.b16 %v399
    %v510 = vunpack.c.h.b16 %v399
    %v511 = vunpack.c.l.b16 %v400
    %v512 = vunpack.c.h.b16 %v400
    %v513 = vunpack.c.l.b16 %v401
    %v514 = vunpack.c.h.b16 %v401
    %v515 = vunpack.c.l.b16 %v402
    %v516 = vunpack.c.h.b16 %v402
    %v517 = vunpack.c.l.b16 %v403
    %v518 = vunpack.c.h.b16 %v403
    %v519 = vunpack.c.l.b16 %v404
    %v520 = vunpack.c.h.b16 %v404
    %v521 = vpack.c.b16 %v459, %v457
    %v522 = vpack.c.b16 %v460, %v458
    %v523 = vpack.c.b16 %v463, %v461
    %v524 = vpack.c.b16 %v464, %v462
    %v525 = vpack.c.b16 %v467, %v465
    %v526 = vpack.c.b16 %v468, %v466
    %v527 = vpack.c.b16 %v471, %v469
    %v528 = vpack.c.b16 %v472, %v470
    %v529 = vpack.c.b16 %v475, %v473
    %v530 = vpack.c.b16 %v476, %v474
    %v531 = vpack.c.b16 %v479, %v477
    %v532 = vpack.c.b16 %v480, %v478
    %v533 = vpack.c.b16 %v483, %v481
    %v534 = vpack.c.b16 %v484, %v482
    %v535 = vpack.c.b16 %v487, %v485
    %v536 = vpack.c.b16 %v488, %v486
    %v537 = vpack.c.b16 %v491, %v489
    %v538 = vpack.c.b16 %v492, %v490
    %v539 = vpack.c.b16 %v495, %v493
    %v540 = vpack.c.b16 %v496, %v494
    %v541 = vpack.c.b16 %v499, %v497
    %v542 = vpack.c.b16 %v500, %v498
    %v543 = vpack.c.b16 %v503, %v501
    %v544 = vpack.c.b16 %v504, %v502
    %v545 = vpack.c.b16 %v507, %v505
    %v546 = vpack.c.b16 %v508, %v506
    %v547 = vpack.c.b16 %v511, %v509
    %v548 = vpack.c.b16 %v512, %v510
    %v549 = vpack.c.b16 %v515, %v513
    %v550 = vpack.c.b16 %v516, %v514
    %v551 = vpack.c.b16 %v519, %v517
    %v552 = vpack.c.b16 %v520, %v518
    %585 = vmatpush.bf16.msra.mxu0 %v412
    %586 = vmatpush.bf16.msra.mxu0 %v411
    %587 = vmatpush.bf16.msra.mxu0 %v410
    %588 = vmatpush.bf16.msra.mxu0 %v409
    %589 = vmatpush.bf16.msra.mxu0 %v408
    %590 = vmatpush.bf16.msra.mxu0 %v407
    %591 = vmatpush.bf16.msra.mxu0 %v406
    %592 = vmatpush.bf16.msra.mxu0 %v405
    %593 = vmatmul.bf16.gmra.mxu0 %v521
    %v594 = vpop.f32.mrf.mxu0
    %v595 = vadd.f32 %v423, %v594
    %v596 = vpop.f32.mrf.mxu0
    %v597 = vadd.f32 %v423, %v596
    %598 = vmatmul.bf16.gmra.mxu0 %v523
    %v599 = vpop.f32.mrf.mxu0
    %v600 = vadd.f32 %v423, %v599
    %v601 = vpop.f32.mrf.mxu0
    %v602 = vadd.f32 %v423, %v601
    %603 = vmatmul.bf16.gmra.mxu0 %v525
    %v604 = vpop.f32.mrf.mxu0
    %v605 = vadd.f32 %v423, %v604
    %v606 = vpop.f32.mrf.mxu0
    %v607 = vadd.f32 %v423, %v606
    %608 = vmatmul.bf16.gmra.mxu0 %v527
    %v609 = vpop.f32.mrf.mxu0
    %v610 = vadd.f32 %v423, %v609
    %v611 = vpop.f32.mrf.mxu0
    %v612 = vadd.f32 %v423, %v611
    %613 = vmatmul.bf16.gmra.mxu0 %v529
    %v614 = vpop.f32.mrf.mxu0
    %v615 = vadd.f32 %v423, %v614
    %v616 = vpop.f32.mrf.mxu0
    %v617 = vadd.f32 %v423, %v616
    %618 = vmatmul.bf16.gmra.mxu0 %v531
    %v619 = vpop.f32.mrf.mxu0
    %v620 = vadd.f32 %v423, %v619
    %v621 = vpop.f32.mrf.mxu0
    %v622 = vadd.f32 %v423, %v621
    %623 = vmatmul.bf16.gmra.mxu0 %v533
    %v624 = vpop.f32.mrf.mxu0
    %v625 = vadd.f32 %v423, %v624
    %v626 = vpop.f32.mrf.mxu0
    %v627 = vadd.f32 %v423, %v626
    %628 = vmatmul.bf16.gmra.mxu0 %v535
    %v629 = vpop.f32.mrf.mxu0
    %v630 = vadd.f32 %v423, %v629
    %v631 = vpop.f32.mrf.mxu0
    %v632 = vadd.f32 %v423, %v631
    %633 = vmatmul.bf16.gmra.mxu0 %v537
    %v634 = vpop.f32.mrf.mxu0
    %v635 = vadd.f32 %v423, %v634
    %v636 = vpop.f32.mrf.mxu0
    %v637 = vadd.f32 %v423, %v636
    %638 = vmatmul.bf16.gmra.mxu0 %v539
    %v639 = vpop.f32.mrf.mxu0
    %v640 = vadd.f32 %v423, %v639
    %v641 = vpop.f32.mrf.mxu0
    %v642 = vadd.f32 %v423, %v641
    %643 = vmatmul.bf16.gmra.mxu0 %v541
    %v644 = vpop.f32.mrf.mxu0
    %v645 = vadd.f32 %v423, %v644
    %v646 = vpop.f32.mrf.mxu0
    %v647 = vadd.f32 %v423, %v646
    %648 = vmatmul.bf16.gmra.mxu0 %v543
    %v649 = vpop.f32.mrf.mxu0
    %v650 = vadd.f32 %v423, %v649
    %v651 = vpop.f32.mrf.mxu0
    %v652 = vadd.f32 %v423, %v651
    %653 = vmatmul.bf16.gmra.mxu0 %v545
    %v654 = vpop.f32.mrf.mxu0
    %v655 = vadd.f32 %v423, %v654
    %v656 = vpop.f32.mrf.mxu0
    %v657 = vadd.f32 %v423, %v656
    %658 = vmatmul.bf16.gmra.mxu0 %v547
    %v659 = vpop.f32.mrf.mxu0
    %v660 = vadd.f32 %v423, %v659
    %v661 = vpop.f32.mrf.mxu0
    %v662 = vadd.f32 %v423, %v661
    %663 = vmatmul.bf16.gmra.mxu0 %v549
    %v664 = vpop.f32.mrf.mxu0
    %v665 = vadd.f32 %v423, %v664
    %v666 = vpop.f32.mrf.mxu0
    %v667 = vadd.f32 %v423, %v666
    %668 = vmatmul.bf16.gmra.mxu0 %v551
    %v669 = vpop.f32.mrf.mxu0
    %v670 = vadd.f32 %v423, %v669
    %v671 = vpop.f32.mrf.mxu0
    %v672 = vadd.f32 %v423, %v671
    %673 = vdwg.mxu0
    %674 = vmatpush.bf16.msra.mxu0 %v420
    %675 = vmatpush.bf16.msra.mxu0 %v419
    %676 = vmatpush.bf16.msra.mxu0 %v418
    %677 = vmatpush.bf16.msra.mxu0 %v417
    %678 = vmatpush.bf16.msra.mxu0 %v416
    %679 = vmatpush.bf16.msra.mxu0 %v415
    %680 = vmatpush.bf16.msra.mxu0 %v414
    %681 = vmatpush.bf16.msra.mxu0 %v413
    %682 = vmatmul.bf16.gmra.mxu0 %v522
    %v683 = vpop.f32.mrf.mxu0
    %v684 = vadd.f32 %v595, %v683
    %v685 = vpop.f32.mrf.mxu0
    %v686 = vadd.f32 %v597, %v685
    %687 = vmatmul.bf16.gmra.mxu0 %v524
    %v688 = vpop.f32.mrf.mxu0
    %v689 = vadd.f32 %v600, %v688
    %v690 = vpop.f32.mrf.mxu0
    %v691 = vadd.f32 %v602, %v690
    %692 = vmatmul.bf16.gmra.mxu0 %v526
    %v693 = vpop.f32.mrf.mxu0
    %v694 = vadd.f32 %v605, %v693
    %v695 = vpop.f32.mrf.mxu0
    %v696 = vadd.f32 %v607, %v695
    %697 = vmatmul.bf16.gmra.mxu0 %v528
    %v698 = vpop.f32.mrf.mxu0
    %v699 = vadd.f32 %v610, %v698
    %v700 = vpop.f32.mrf.mxu0
    %v701 = vadd.f32 %v612, %v700
    %702 = vmatmul.bf16.gmra.mxu0 %v530
    %v703 = vpop.f32.mrf.mxu0
    %v704 = vadd.f32 %v615, %v703
    %v705 = vpop.f32.mrf.mxu0
    %v706 = vadd.f32 %v617, %v705
    %707 = vmatmul.bf16.gmra.mxu0 %v532
    %v708 = vpop.f32.mrf.mxu0
    %v709 = vadd.f32 %v620, %v708
    %v710 = vpop.f32.mrf.mxu0
    %v711 = vadd.f32 %v622, %v710
    %712 = vmatmul.bf16.gmra.mxu0 %v534
    %v713 = vpop.f32.mrf.mxu0
    %v714 = vadd.f32 %v625, %v713
    %v715 = vpop.f32.mrf.mxu0
    %v716 = vadd.f32 %v627, %v715
    %717 = vmatmul.bf16.gmra.mxu0 %v536
    %v718 = vpop.f32.mrf.mxu0
    %v719 = vadd.f32 %v630, %v718
    %v720 = vpop.f32.mrf.mxu0
    %v721 = vadd.f32 %v632, %v720
    %722 = vmatmul.bf16.gmra.mxu0 %v538
    %v723 = vpop.f32.mrf.mxu0
    %v724 = vadd.f32 %v635, %v723
    %v725 = vpop.f32.mrf.mxu0
    %v726 = vadd.f32 %v637, %v725
    %727 = vmatmul.bf16.gmra.mxu0 %v540
    %v728 = vpop.f32.mrf.mxu0
    %v729 = vadd.f32 %v640, %v728
    %v730 = vpop.f32.mrf.mxu0
    %v731 = vadd.f32 %v642, %v730
    %732 = vmatmul.bf16.gmra.mxu0 %v542
    %v733 = vpop.f32.mrf.mxu0
    %v734 = vadd.f32 %v645, %v733
    %v735 = vpop.f32.mrf.mxu0
    %v736 = vadd.f32 %v647, %v735
    %737 = vmatmul.bf16.gmra.mxu0 %v544
    %v738 = vpop.f32.mrf.mxu0
    %v739 = vadd.f32 %v650, %v738
    %v740 = vpop.f32.mrf.mxu0
    %v741 = vadd.f32 %v652, %v740
    %742 = vmatmul.bf16.gmra.mxu0 %v546
    %v743 = vpop.f32.mrf.mxu0
    %v744 = vadd.f32 %v655, %v743
    %v745 = vpop.f32.mrf.mxu0
    %v746 = vadd.f32 %v657, %v745
    %747 = vmatmul.bf16.gmra.mxu0 %v548
    %v748 = vpop.f32.mrf.mxu0
    %v749 = vadd.f32 %v660, %v748
    %v750 = vpop.f32.mrf.mxu0
    %v751 = vadd.f32 %v662, %v750
    %752 = vmatmul.bf16.gmra.mxu0 %v550
    %v753 = vpop.f32.mrf.mxu0
    %v754 = vadd.f32 %v665, %v753
    %v755 = vpop.f32.mrf.mxu0
    %v756 = vadd.f32 %v667, %v755
    %757 = vmatmul.bf16.gmra.mxu0 %v552
    %v758 = vpop.f32.mrf.mxu0
    %v759 = vadd.f32 %v670, %v758
    %v760 = vpop.f32.mrf.mxu0
    %v761 = vadd.f32 %v672, %v760
    %762 = vdwg.mxu0
    %vm763 = vcmp.ge.f32.partialorder %v684, 0.0
    %vm764 = vcmp.ge.f32.partialorder %v686, 0.0
    %vm765 = vcmp.ge.f32.partialorder %v689, 0.0
    %vm766 = vcmp.ge.f32.partialorder %v691, 0.0
    %vm767 = vcmp.ge.f32.partialorder %v694, 0.0
    %vm768 = vcmp.ge.f32.partialorder %v696, 0.0
    %vm769 = vcmp.ge.f32.partialorder %v699, 0.0
    %vm770 = vcmp.ge.f32.partialorder %v701, 0.0
    %vm771 = vcmp.ge.f32.partialorder %v704, 0.0
    %vm772 = vcmp.ge.f32.partialorder %v706, 0.0
    %vm773 = vcmp.ge.f32.partialorder %v709, 0.0
    %vm774 = vcmp.ge.f32.partialorder %v711, 0.0
    %vm775 = vcmp.ge.f32.partialorder %v714, 0.0
    %vm776 = vcmp.ge.f32.partialorder %v716, 0.0
    %vm777 = vcmp.ge.f32.partialorder %v719, 0.0
    %vm778 = vcmp.ge.f32.partialorder %v721, 0.0
    %vm779 = vcmp.ge.f32.partialorder %v724, 0.0
    %vm780 = vcmp.ge.f32.partialorder %v726, 0.0
    %vm781 = vcmp.ge.f32.partialorder %v729, 0.0
    %vm782 = vcmp.ge.f32.partialorder %v731, 0.0
    %vm783 = vcmp.ge.f32.partialorder %v734, 0.0
    %vm784 = vcmp.ge.f32.partialorder %v736, 0.0
    %vm785 = vcmp.ge.f32.partialorder %v739, 0.0
    %vm786 = vcmp.ge.f32.partialorder %v741, 0.0
    %vm787 = vcmp.ge.f32.partialorder %v744, 0.0
    %vm788 = vcmp.ge.f32.partialorder %v746, 0.0
    %vm789 = vcmp.ge.f32.partialorder %v749, 0.0
    %vm790 = vcmp.ge.f32.partialorder %v751, 0.0
    %vm791 = vcmp.ge.f32.partialorder %v754, 0.0
    %vm792 = vcmp.ge.f32.partialorder %v756, 0.0
    %vm793 = vcmp.ge.f32.partialorder %v759, 0.0
    %vm794 = vcmp.ge.f32.partialorder %v761, 0.0
    %v795 = vstv %s91
    %v796 = vmul.f32 %v795, %v684
    %v797 = vmul.f32 %v795, %v686
    %v798 = vmul.f32 %v795, %v689
    %v799 = vmul.f32 %v795, %v691
    %v800 = vmul.f32 %v795, %v694
    %v801 = vmul.f32 %v795, %v696
    %v802 = vmul.f32 %v795, %v699
    %v803 = vmul.f32 %v795, %v701
    %v804 = vmul.f32 %v795, %v704
    %v805 = vmul.f32 %v795, %v706
    %v806 = vmul.f32 %v795, %v709
    %v807 = vmul.f32 %v795, %v711
    %v808 = vmul.f32 %v795, %v714
    %v809 = vmul.f32 %v795, %v716
    %v810 = vmul.f32 %v795, %v719
    %v811 = vmul.f32 %v795, %v721
    %v812 = vmul.f32 %v795, %v724
    %v813 = vmul.f32 %v795, %v726
    %v814 = vmul.f32 %v795, %v729
    %v815 = vmul.f32 %v795, %v731
    %v816 = vmul.f32 %v795, %v734
    %v817 = vmul.f32 %v795, %v736
    %v818 = vmul.f32 %v795, %v739
    %v819 = vmul.f32 %v795, %v741
    %v820 = vmul.f32 %v795, %v744
    %v821 = vmul.f32 %v795, %v746
    %v822 = vmul.f32 %v795, %v749
    %v823 = vmul.f32 %v795, %v751
    %v824 = vmul.f32 %v795, %v754
    %v825 = vmul.f32 %v795, %v756
    %v826 = vmul.f32 %v795, %v759
    %v827 = vmul.f32 %v795, %v761
    %v828 = vsel %vm763, %v684, %v796
    %v829 = vsel %vm764, %v686, %v797
    %v830 = vsel %vm765, %v689, %v798
    %v831 = vsel %vm766, %v691, %v799
    %v832 = vsel %vm767, %v694, %v800
    %v833 = vsel %vm768, %v696, %v801
    %v834 = vsel %vm769, %v699, %v802
    %v835 = vsel %vm770, %v701, %v803
    %v836 = vsel %vm771, %v704, %v804
    %v837 = vsel %vm772, %v706, %v805
    %v838 = vsel %vm773, %v709, %v806
    %v839 = vsel %vm774, %v711, %v807
    %v840 = vsel %vm775, %v714, %v808
    %v841 = vsel %vm776, %v716, %v809
    %v842 = vsel %vm777, %v719, %v810
    %v843 = vsel %vm778, %v721, %v811
    %v844 = vsel %vm779, %v724, %v812
    %v845 = vsel %vm780, %v726, %v813
    %v846 = vsel %vm781, %v729, %v814
    %v847 = vsel %vm782, %v731, %v815
    %v848 = vsel %vm783, %v734, %v816
    %v849 = vsel %vm784, %v736, %v817
    %v850 = vsel %vm785, %v739, %v818
    %v851 = vsel %vm786, %v741, %v819
    %v852 = vsel %vm787, %v744, %v820
    %v853 = vsel %vm788, %v746, %v821
    %v854 = vsel %vm789, %v749, %v822
    %v855 = vsel %vm790, %v751, %v823
    %v856 = vsel %vm791, %v754, %v824
    %v857 = vsel %vm792, %v756, %v825
    %v858 = vsel %vm793, %v759, %v826
    %v859 = vsel %vm794, %v761, %v827
    %v860 = vpack.c.bf16 %v829, %v828
    %v861 = vpack.c.bf16 %v831, %v830
    %v862 = vpack.c.bf16 %v833, %v832
    %v863 = vpack.c.bf16 %v835, %v834
    %v864 = vpack.c.bf16 %v837, %v836
    %v865 = vpack.c.bf16 %v839, %v838
    %v866 = vpack.c.bf16 %v841, %v840
    %v867 = vpack.c.bf16 %v843, %v842
    %v868 = vpack.c.bf16 %v845, %v844
    %v869 = vpack.c.bf16 %v847, %v846
    %v870 = vpack.c.bf16 %v849, %v848
    %v871 = vpack.c.bf16 %v851, %v850
    %v872 = vpack.c.bf16 %v853, %v852
    %v873 = vpack.c.bf16 %v855, %v854
    %v874 = vpack.c.bf16 %v857, %v856
    %v875 = vpack.c.bf16 %v859, %v858
    %v876 = vld [vmem:[#allocation9] sm:$0xf]
    %v877 = vld [vmem:[#allocation9 + $0x4] sm:$0xf]
    %v878 = vld [vmem:[#allocation9 + $0x8] sm:$0xf]
    %v879 = vld [vmem:[#allocation9 + $0xc] sm:$0xf]
    %v880 = vld [vmem:[#allocation9 + $0x10] sm:$0xf]
    %v881 = vld [vmem:[#allocation9 + $0x14] sm:$0xf]
    %v882 = vld [vmem:[#allocation9 + $0x18] sm:$0xf]
    %v883 = vld [vmem:[#allocation9 + $0x1c] sm:$0xf]
    %v884 = vld [vmem:[#allocation9 + $0x20] sm:$0xf]
    %v885 = vld [vmem:[#allocation9 + $0x24] sm:$0xf]
    %v886 = vld [vmem:[#allocation9 + $0x28] sm:$0xf]
    %v887 = vld [vmem:[#allocation9 + $0x2c] sm:$0xf]
    %v888 = vld [vmem:[#allocation9 + $0x30] sm:$0xf]
    %v889 = vld [vmem:[#allocation9 + $0x34] sm:$0xf]
    %v890 = vld [vmem:[#allocation9 + $0x38] sm:$0xf]
    %v891 = vld [vmem:[#allocation9 + $0x3c] sm:$0xf]
    %v908 = vunpack.c.l.b16 %v876
    %v909 = vunpack.c.l.b16 %v877
    %v910 = vunpack.c.l.b16 %v878
    %v911 = vunpack.c.l.b16 %v879
    %v912 = vunpack.c.l.b16 %v880
    %v913 = vunpack.c.l.b16 %v881
    %v914 = vunpack.c.l.b16 %v882
    %v915 = vunpack.c.l.b16 %v883
    %v916 = vunpack.c.l.b16 %v884
    %v917 = vunpack.c.l.b16 %v885
    %v918 = vunpack.c.l.b16 %v886
    %v919 = vunpack.c.l.b16 %v887
    %v920 = vunpack.c.l.b16 %v888
    %v921 = vunpack.c.l.b16 %v889
    %v922 = vunpack.c.l.b16 %v890
    %v923 = vunpack.c.l.b16 %v891
    %v924 = vpack.c.b16 %v909, %v908
    %v925 = vpack.c.b16 %v911, %v910
    %v926 = vpack.c.b16 %v913, %v912
    %v927 = vpack.c.b16 %v915, %v914
    %v928 = vpack.c.b16 %v917, %v916
    %v929 = vpack.c.b16 %v919, %v918
    %v930 = vpack.c.b16 %v921, %v920
    %v931 = vpack.c.b16 %v923, %v922
    %940 = vmatpush.bf16.msra.mxu0 %v931
    %941 = vmatpush.bf16.msra.mxu0 %v930
    %942 = vmatpush.bf16.msra.mxu0 %v929
    %943 = vmatpush.bf16.msra.mxu0 %v928
    %944 = vmatpush.bf16.msra.mxu0 %v927
    %945 = vmatpush.bf16.msra.mxu0 %v926
    %946 = vmatpush.bf16.msra.mxu0 %v925
    %947 = vmatpush.bf16.msra.mxu0 %v924
    %948 = vmatmul.bf16.gmra.mxu0 %v860
    %v949 = vpop.f32.mrf.mxu0
    %v950 = vadd.f32 0.0, %v949
    %v951 = vpop.f32.mrf.mxu0
    %v952 = vadd.f32 0.0, %v951
    %953 = vmatmul.bf16.gmra.mxu0 %v861
    %v954 = vpop.f32.mrf.mxu0
    %v955 = vadd.f32 0.0, %v954
    %v956 = vpop.f32.mrf.mxu0
    %v957 = vadd.f32 0.0, %v956
    %958 = vmatmul.bf16.gmra.mxu0 %v862
    %v959 = vpop.f32.mrf.mxu0
    %v960 = vadd.f32 0.0, %v959
    %v961 = vpop.f32.mrf.mxu0
    %v962 = vadd.f32 0.0, %v961
    %963 = vmatmul.bf16.gmra.mxu0 %v863
    %v964 = vpop.f32.mrf.mxu0
    %v965 = vadd.f32 0.0, %v964
    %v966 = vpop.f32.mrf.mxu0
    %v967 = vadd.f32 0.0, %v966
    %968 = vmatmul.bf16.gmra.mxu0 %v864
    %v969 = vpop.f32.mrf.mxu0
    %v970 = vadd.f32 0.0, %v969
    %v971 = vpop.f32.mrf.mxu0
    %v972 = vadd.f32 0.0, %v971
    %973 = vmatmul.bf16.gmra.mxu0 %v865
    %v974 = vpop.f32.mrf.mxu0
    %v975 = vadd.f32 0.0, %v974
    %v976 = vpop.f32.mrf.mxu0
    %v977 = vadd.f32 0.0, %v976
    %978 = vmatmul.bf16.gmra.mxu0 %v866
    %v979 = vpop.f32.mrf.mxu0
    %v980 = vadd.f32 0.0, %v979
    %v981 = vpop.f32.mrf.mxu0
    %v982 = vadd.f32 0.0, %v981
    %983 = vmatmul.bf16.gmra.mxu0 %v867
    %v984 = vpop.f32.mrf.mxu0
    %v985 = vadd.f32 0.0, %v984
    %v986 = vpop.f32.mrf.mxu0
    %v987 = vadd.f32 0.0, %v986
    %988 = vmatmul.bf16.gmra.mxu0 %v868
    %v989 = vpop.f32.mrf.mxu0
    %v990 = vadd.f32 0.0, %v989
    %v991 = vpop.f32.mrf.mxu0
    %v992 = vadd.f32 0.0, %v991
    %993 = vmatmul.bf16.gmra.mxu0 %v869
    %v994 = vpop.f32.mrf.mxu0
    %v995 = vadd.f32 0.0, %v994
    %v996 = vpop.f32.mrf.mxu0
    %v997 = vadd.f32 0.0, %v996
    %998 = vmatmul.bf16.gmra.mxu0 %v870
    %v999 = vpop.f32.mrf.mxu0
    %v1000 = vadd.f32 0.0, %v999
    %v1001 = vpop.f32.mrf.mxu0
    %v1002 = vadd.f32 0.0, %v1001
    %1003 = vmatmul.bf16.gmra.mxu0 %v871
    %v1004 = vpop.f32.mrf.mxu0
    %v1005 = vadd.f32 0.0, %v1004
    %v1006 = vpop.f32.mrf.mxu0
    %v1007 = vadd.f32 0.0, %v1006
    %1008 = vmatmul.bf16.gmra.mxu0 %v872
    %v1009 = vpop.f32.mrf.mxu0
    %v1010 = vadd.f32 0.0, %v1009
    %v1011 = vpop.f32.mrf.mxu0
    %v1012 = vadd.f32 0.0, %v1011
    %1013 = vmatmul.bf16.gmra.mxu0 %v873
    %v1014 = vpop.f32.mrf.mxu0
    %v1015 = vadd.f32 0.0, %v1014
    %v1016 = vpop.f32.mrf.mxu0
    %v1017 = vadd.f32 0.0, %v1016
    %1018 = vmatmul.bf16.gmra.mxu0 %v874
    %v1019 = vpop.f32.mrf.mxu0
    %v1020 = vadd.f32 0.0, %v1019
    %v1021 = vpop.f32.mrf.mxu0
    %v1022 = vadd.f32 0.0, %v1021
    %1023 = vmatmul.bf16.gmra.mxu0 %v875
    %v1024 = vpop.f32.mrf.mxu0
    %v1025 = vadd.f32 0.0, %v1024
    %v1026 = vpop.f32.mrf.mxu0
    %v1027 = vadd.f32 0.0, %v1026
    %1028 = vdwg.mxu0
    %v1029 = vpack.c.bf16 %v952, %v950
    %v1030 = vpack.c.bf16 %v957, %v955
    %v1031 = vpack.c.bf16 %v962, %v960
    %v1032 = vpack.c.bf16 %v967, %v965
    %v1033 = vpack.c.bf16 %v972, %v970
    %v1034 = vpack.c.bf16 %v977, %v975
    %v1035 = vpack.c.bf16 %v982, %v980
    %v1036 = vpack.c.bf16 %v987, %v985
    %v1037 = vpack.c.bf16 %v992, %v990
    %v1038 = vpack.c.bf16 %v997, %v995
    %v1039 = vpack.c.bf16 %v1002, %v1000
    %v1040 = vpack.c.bf16 %v1007, %v1005
    %v1041 = vpack.c.bf16 %v1012, %v1010
    %v1042 = vpack.c.bf16 %v1017, %v1015
    %v1043 = vpack.c.bf16 %v1022, %v1020
    %v1044 = vpack.c.bf16 %v1027, %v1025
    %v1045 = vld [vmem:[%s5] sm:$0x1]
    %v1047 = vperm.slane %v1045, 0
    %1049 = vmatpush.bf16.msra.mxu0 %v1036
    %1050 = vmatpush.bf16.msra.mxu0 %v1035
    %1051 = vmatpush.bf16.msra.mxu0 %v1034
    %1052 = vmatpush.bf16.msra.mxu0 %v1033
    %1053 = vmatpush.bf16.msra.mxu0 %v1032
    %1054 = vmatpush.bf16.msra.mxu0 %v1031
    %1055 = vmatpush.bf16.msra.mxu0 %v1030
    %1056 = vmatpush.bf16.msra.mxu0 %v1029
    %1057 = vmatmul.bf16.gmra.mxu0 %v521
    %v1058 = vpop.f32.mrf.mxu0
    %v1059 = vadd.f32 %v1047, %v1058
    %v1060 = vpop.f32.mrf.mxu0
    %v1061 = vadd.f32 %v1047, %v1060
    %1062 = vmatmul.bf16.gmra.mxu0 %v523
    %v1063 = vpop.f32.mrf.mxu0
    %v1064 = vadd.f32 %v1047, %v1063
    %v1065 = vpop.f32.mrf.mxu0
    %v1066 = vadd.f32 %v1047, %v1065
    %1067 = vmatmul.bf16.gmra.mxu0 %v525
    %v1068 = vpop.f32.mrf.mxu0
    %v1069 = vadd.f32 %v1047, %v1068
    %v1070 = vpop.f32.mrf.mxu0
    %v1071 = vadd.f32 %v1047, %v1070
    %1072 = vmatmul.bf16.gmra.mxu0 %v527
    %v1073 = vpop.f32.mrf.mxu0
    %v1074 = vadd.f32 %v1047, %v1073
    %v1075 = vpop.f32.mrf.mxu0
    %v1076 = vadd.f32 %v1047, %v1075
    %1077 = vmatmul.bf16.gmra.mxu0 %v529
    %v1078 = vpop.f32.mrf.mxu0
    %v1079 = vadd.f32 %v1047, %v1078
    %v1080 = vpop.f32.mrf.mxu0
    %v1081 = vadd.f32 %v1047, %v1080
    %1082 = vmatmul.bf16.gmra.mxu0 %v531
    %v1083 = vpop.f32.mrf.mxu0
    %v1084 = vadd.f32 %v1047, %v1083
    %v1085 = vpop.f32.mrf.mxu0
    %v1086 = vadd.f32 %v1047, %v1085
    %1087 = vmatmul.bf16.gmra.mxu0 %v533
    %v1088 = vpop.f32.mrf.mxu0
    %v1089 = vadd.f32 %v1047, %v1088
    %v1090 = vpop.f32.mrf.mxu0
    %v1091 = vadd.f32 %v1047, %v1090
    %1092 = vmatmul.bf16.gmra.mxu0 %v535
    %v1093 = vpop.f32.mrf.mxu0
    %v1094 = vadd.f32 %v1047, %v1093
    %v1095 = vpop.f32.mrf.mxu0
    %v1096 = vadd.f32 %v1047, %v1095
    %1097 = vmatmul.bf16.gmra.mxu0 %v537
    %v1098 = vpop.f32.mrf.mxu0
    %v1099 = vadd.f32 %v1047, %v1098
    %v1100 = vpop.f32.mrf.mxu0
    %v1101 = vadd.f32 %v1047, %v1100
    %1102 = vmatmul.bf16.gmra.mxu0 %v539
    %v1103 = vpop.f32.mrf.mxu0
    %v1104 = vadd.f32 %v1047, %v1103
    %v1105 = vpop.f32.mrf.mxu0
    %v1106 = vadd.f32 %v1047, %v1105
    %1107 = vmatmul.bf16.gmra.mxu0 %v541
    %v1108 = vpop.f32.mrf.mxu0
    %v1109 = vadd.f32 %v1047, %v1108
    %v1110 = vpop.f32.mrf.mxu0
    %v1111 = vadd.f32 %v1047, %v1110
    %1112 = vmatmul.bf16.gmra.mxu0 %v543
    %v1113 = vpop.f32.mrf.mxu0
    %v1114 = vadd.f32 %v1047, %v1113
    %v1115 = vpop.f32.mrf.mxu0
    %v1116 = vadd.f32 %v1047, %v1115
    %1117 = vmatmul.bf16.gmra.mxu0 %v545
    %v1118 = vpop.f32.mrf.mxu0
    %v1119 = vadd.f32 %v1047, %v1118
    %v1120 = vpop.f32.mrf.mxu0
    %v1121 = vadd.f32 %v1047, %v1120
    %1122 = vmatmul.bf16.gmra.mxu0 %v547
    %v1123 = vpop.f32.mrf.mxu0
    %v1124 = vadd.f32 %v1047, %v1123
    %v1125 = vpop.f32.mrf.mxu0
    %v1126 = vadd.f32 %v1047, %v1125
    %1127 = vmatmul.bf16.gmra.mxu0 %v549
    %v1128 = vpop.f32.mrf.mxu0
    %v1129 = vadd.f32 %v1047, %v1128
    %v1130 = vpop.f32.mrf.mxu0
    %v1131 = vadd.f32 %v1047, %v1130
    %1132 = vmatmul.bf16.gmra.mxu0 %v551
    %v1133 = vpop.f32.mrf.mxu0
    %v1134 = vadd.f32 %v1047, %v1133
    %v1135 = vpop.f32.mrf.mxu0
    %v1136 = vadd.f32 %v1047, %v1135
    %1137 = vdwg.mxu0
    %1138 = vmatpush.bf16.msra.mxu0 %v1044
    %1139 = vmatpush.bf16.msra.mxu0 %v1043
    %1140 = vmatpush.bf16.msra.mxu0 %v1042
    %1141 = vmatpush.bf16.msra.mxu0 %v1041
    %1142 = vmatpush.bf16.msra.mxu0 %v1040
    %1143 = vmatpush.bf16.msra.mxu0 %v1039
    %1144 = vmatpush.bf16.msra.mxu0 %v1038
    %1145 = vmatpush.bf16.msra.mxu0 %v1037
    %1146 = vmatmul.bf16.gmra.mxu0 %v522
    %v1147 = vpop.f32.mrf.mxu0
    %v1148 = vadd.f32 %v1059, %v1147
    %v1149 = vpop.f32.mrf.mxu0
    %v1150 = vadd.f32 %v1061, %v1149
    %1151 = vmatmul.bf16.gmra.mxu0 %v524
    %v1152 = vpop.f32.mrf.mxu0
    %v1153 = vadd.f32 %v1064, %v1152
    %v1154 = vpop.f32.mrf.mxu0
    %v1155 = vadd.f32 %v1066, %v1154
    %1156 = vmatmul.bf16.gmra.mxu0 %v526
    %v1157 = vpop.f32.mrf.mxu0
    %v1158 = vadd.f32 %v1069, %v1157
    %v1159 = vpop.f32.mrf.mxu0
    %v1160 = vadd.f32 %v1071, %v1159
    %1161 = vmatmul.bf16.gmra.mxu0 %v528
    %v1162 = vpop.f32.mrf.mxu0
    %v1163 = vadd.f32 %v1074, %v1162
    %v1164 = vpop.f32.mrf.mxu0
    %v1165 = vadd.f32 %v1076, %v1164
    %1166 = vmatmul.bf16.gmra.mxu0 %v530
    %v1167 = vpop.f32.mrf.mxu0
    %v1168 = vadd.f32 %v1079, %v1167
    %v1169 = vpop.f32.mrf.mxu0
    %v1170 = vadd.f32 %v1081, %v1169
    %1171 = vmatmul.bf16.gmra.mxu0 %v532
    %v1172 = vpop.f32.mrf.mxu0
    %v1173 = vadd.f32 %v1084, %v1172
    %v1174 = vpop.f32.mrf.mxu0
    %v1175 = vadd.f32 %v1086, %v1174
    %1176 = vmatmul.bf16.gmra.mxu0 %v534
    %v1177 = vpop.f32.mrf.mxu0
    %v1178 = vadd.f32 %v1089, %v1177
    %v1179 = vpop.f32.mrf.mxu0
    %v1180 = vadd.f32 %v1091, %v1179
    %1181 = vmatmul.bf16.gmra.mxu0 %v536
    %v1182 = vpop.f32.mrf.mxu0
    %v1183 = vadd.f32 %v1094, %v1182
    %v1184 = vpop.f32.mrf.mxu0
    %v1185 = vadd.f32 %v1096, %v1184
    %1186 = vmatmul.bf16.gmra.mxu0 %v538
    %v1187 = vpop.f32.mrf.mxu0
    %v1188 = vadd.f32 %v1099, %v1187
    %v1189 = vpop.f32.mrf.mxu0
    %v1190 = vadd.f32 %v1101, %v1189
    %1191 = vmatmul.bf16.gmra.mxu0 %v540
    %v1192 = vpop.f32.mrf.mxu0
    %v1193 = vadd.f32 %v1104, %v1192
    %v1194 = vpop.f32.mrf.mxu0
    %v1195 = vadd.f32 %v1106, %v1194
    %1196 = vmatmul.bf16.gmra.mxu0 %v542
    %v1197 = vpop.f32.mrf.mxu0
    %v1198 = vadd.f32 %v1109, %v1197
    %v1199 = vpop.f32.mrf.mxu0
    %v1200 = vadd.f32 %v1111, %v1199
    %1201 = vmatmul.bf16.gmra.mxu0 %v544
    %v1202 = vpop.f32.mrf.mxu0
    %v1203 = vadd.f32 %v1114, %v1202
    %v1204 = vpop.f32.mrf.mxu0
    %v1205 = vadd.f32 %v1116, %v1204
    %1206 = vmatmul.bf16.gmra.mxu0 %v546
    %v1207 = vpop.f32.mrf.mxu0
    %v1208 = vadd.f32 %v1119, %v1207
    %v1209 = vpop.f32.mrf.mxu0
    %v1210 = vadd.f32 %v1121, %v1209
    %1211 = vmatmul.bf16.gmra.mxu0 %v548
    %v1212 = vpop.f32.mrf.mxu0
    %v1213 = vadd.f32 %v1124, %v1212
    %v1214 = vpop.f32.mrf.mxu0
    %v1215 = vadd.f32 %v1126, %v1214
    %1216 = vmatmul.bf16.gmra.mxu0 %v550
    %v1217 = vpop.f32.mrf.mxu0
    %v1218 = vadd.f32 %v1129, %v1217
    %v1219 = vpop.f32.mrf.mxu0
    %v1220 = vadd.f32 %v1131, %v1219
    %1221 = vmatmul.bf16.gmra.mxu0 %v552
    %v1222 = vpop.f32.mrf.mxu0
    %v1223 = vadd.f32 %v1134, %v1222
    %v1224 = vpop.f32.mrf.mxu0
    %v1225 = vadd.f32 %v1136, %v1224
    %1226 = vdwg.mxu0
    %1227 = vst [vmem:[#allocation11] sm:$0xff] %v1148
    %1228 = vst [vmem:[#allocation11 + $0x8] sm:$0xff] %v1150
    %1229 = vst [vmem:[#allocation11 + $0x10] sm:$0xff] %v1153
    %1230 = vst [vmem:[#allocation11 + $0x18] sm:$0xff] %v1155
    %1231 = vst [vmem:[#allocation11 + $0x20] sm:$0xff] %v1158
    %1232 = vst [vmem:[#allocation11 + $0x28] sm:$0xff] %v1160
    %1233 = vst [vmem:[#allocation11 + $0x30] sm:$0xff] %v1163
    %1234 = vst [vmem:[#allocation11 + $0x38] sm:$0xff] %v1165
    %1235 = vst [vmem:[#allocation11 + $0x40] sm:$0xff] %v1168
    %1236 = vst [vmem:[#allocation11 + $0x48] sm:$0xff] %v1170
    %1237 = vst [vmem:[#allocation11 + $0x50] sm:$0xff] %v1173
    %1238 = vst [vmem:[#allocation11 + $0x58] sm:$0xff] %v1175
    %1239 = vst [vmem:[#allocation11 + $0x60] sm:$0xff] %v1178
    %1240 = vst [vmem:[#allocation11 + $0x68] sm:$0xff] %v1180
    %1241 = vst [vmem:[#allocation11 + $0x70] sm:$0xff] %v1183
    %1242 = vst [vmem:[#allocation11 + $0x78] sm:$0xff] %v1185
    %1243 = vst [vmem:[#allocation11 + $0x80] sm:$0xff] %v1188
    %1244 = vst [vmem:[#allocation11 + $0x88] sm:$0xff] %v1190
    %1245 = vst [vmem:[#allocation11 + $0x90] sm:$0xff] %v1193
    %1246 = vst [vmem:[#allocation11 + $0x98] sm:$0xff] %v1195
    %1247 = vst [vmem:[#allocation11 + $0xa0] sm:$0xff] %v1198
    %1248 = vst [vmem:[#allocation11 + $0xa8] sm:$0xff] %v1200
    %1249 = vst [vmem:[#allocation11 + $0xb0] sm:$0xff] %v1203
    %1250 = vst [vmem:[#allocation11 + $0xb8] sm:$0xff] %v1205
    %1251 = vst [vmem:[#allocation11 + $0xc0] sm:$0xff] %v1208
    %1252 = vst [vmem:[#allocation11 + $0xc8] sm:$0xff] %v1210
    %1253 = vst [vmem:[#allocation11 + $0xd0] sm:$0xff] %v1213
    %1254 = vst [vmem:[#allocation11 + $0xd8] sm:$0xff] %v1215
    %1255 = vst [vmem:[#allocation11 + $0xe0] sm:$0xff] %v1218
    %1256 = vst [vmem:[#allocation11 + $0xe8] sm:$0xff] %v1220
    %1257 = vst [vmem:[#allocation11 + $0xf0] sm:$0xff] %v1223
    %1258 = vst [vmem:[#allocation11 + $0xf8] sm:$0xff] %v1225
    // Predicated region
    $region46: #{tpu_custom_call.1} parent=1 // pred_check
      _
    $region47: #{tpu_custom_call.1} parent=1 // pred_check_branch
      %1260 = sbr.rel (0) target = $region49
    $region48: #{tpu_custom_call.1} parent=1 // pred_region
      %1262 = vsyncadd [#allocation5], 0
      %s1263 = sshll.u32 [#allocation11], 4
      %s1264 = int_to_ptr.vmem [resolvable:$true] %s1263
      %s1265 = sshll.u32 %s7, 4
      %s1266 = int_to_ptr.hbm [resolvable:$true] %s1265
      %1271 = dma.vmem_to_hbm [thread:$0]  %s1264, 4096, %s1266, [#allocation5], 128, 128, 8
    $region49: #{tpu_custom_call.1} parent=1 // pred_fallthru
      _
    // Predicated region
    $region50: #{tpu_custom_call.1} parent=1 // pred_check
      _
    $region51: #{tpu_custom_call.1} parent=1 // pred_check_branch
      %1273 = sbr.rel (0) target = $region53
    $region52: #{tpu_custom_call.1} parent=1 // pred_region
      %1275 = dma.done [#allocation5], 4096
    $region53: #{tpu_custom_call.1} parent=1 // pred_fallthru
      _
    %1276 = vsyncpa [#allocation4], 1
    %1277 = vsyncpa [#allocation7], 1
    %1278 = vsyncpa [#allocation10], 1
    %1279 = vsyncpa [#allocation5], 1

</llo_original>
